<compile_context>
chip_gen: v5e
topology: v5e:2x2
jax: 0.10.0
libtpu: 0.0.40
codegen_flags: <defaults>
</compile_context>

<pallas_src>
import functools

import jax
import jax.numpy as jnp
from jax.experimental import pallas as pl
from jax.experimental.pallas import tpu as pltpu

LANES = 128


def _dice_sums_kernel(p_ref, t_ref, out_ref, acc_i, acc_p, acc_t, *,
                      tile_rows, last_tile_rows, mask_last):
    c = pl.program_id(0)   # split axis ("parallel": megacore shard on v7x)
    j = pl.program_id(1)   # sequential reduction axis ("arbitrary")

    @pl.when(j == 0)
    def _():
        acc_i[...] = jnp.zeros_like(acc_i)
        acc_p[...] = jnp.zeros_like(acc_p)
        acc_t[...] = jnp.zeros_like(acc_t)

    # Cast + sigmoid in-kernel: reduction is HBM-byte-bound, VPU/EUP have slack.
    p = jax.nn.sigmoid(p_ref[...].astype(jnp.float32))
    t = t_ref[...].astype(jnp.float32)

    def accumulate(pp, tt):
        # Per-lane partial sums; cross-lane reduce deferred to the wrapper.
        acc_i[...] += jnp.sum(pp * tt, axis=0, keepdims=True)
        acc_p[...] += jnp.sum(pp, axis=0, keepdims=True)
        acc_t[...] += jnp.sum(tt, axis=0, keepdims=True)

    if mask_last:
        # Only the globally-last tile can be partial; every interior tile
        # skips the mask work entirely via pl.when.
        is_last = jnp.logical_and(c == pl.num_programs(0) - 1,
                                  j == pl.num_programs(1) - 1)

        @pl.when(is_last)
        def _():
            row_iota = jax.lax.broadcasted_iota(
                jnp.int32, (tile_rows, LANES), 0)
            valid = row_iota < last_tile_rows   # static threshold: no overflow
            # Select AFTER sigmoid: undefined rows of the partial block must be
            # replaced (they may be NaN), never multiplied.
            accumulate(jnp.where(valid, p, 0.0), jnp.where(valid, t, 0.0))

        @pl.when(jnp.logical_not(is_last))
        def _():
            accumulate(p, t)
    else:
        accumulate(p, t)

    @pl.when(j == pl.num_programs(1) - 1)
    def _():
        out_ref[0, 0:1, :] = acc_i[...]
        out_ref[0, 1:2, :] = acc_p[...]
        out_ref[0, 2:3, :] = acc_t[...]


def _tensorcores_per_chip():
    # 2 TensorCores/chip only on v7x; v5e/v6e (and older) are single-TC.
    try:
        kind = jax.devices()[0].device_kind.lower()
    except Exception:
        return 1
    return 2 if ("v7" in kind or "tpu7" in kind) else 1


def dice_loss(preds, targets, smooth=1.0, *, tile_rows=4096, num_splits=None):
    """Matches DiceLoss.forward(preds, targets, smooth)."""
    n = int(preds.size)
    p_flat = preds.reshape(-1)
    t_flat = targets.reshape(-1)

    rows = n // LANES            # complete lane-rows handled by the kernel
    tail = n - rows * LANES      # <128 leftover elements -> wrapper epilogue

    sum_i = jnp.float32(0.0)
    sum_p = jnp.float32(0.0)
    sum_t = jnp.float32(0.0)

    if rows > 0:
        # Lane-dense prefix view: offset-0 slice + reshape, no pad copy.
        p2d = p_flat[: rows * LANES].reshape(rows, LANES)
        t2d = t_flat[: rows * LANES].reshape(rows, LANES)

        # Row tile: as large as allowed (HBM-bound streaming), sublane-aligned.
        tr = min(int(tile_rows), rows)
        if tr != rows:
            # Multiple of 32 keeps int8/bf16 inputs legal too; >=8 for f32.
            tr = (tr // 32) * 32 if tr >= 32 else max(8, (tr // 8) * 8)
        total_tiles = pl.cdiv(rows, tr)

        # Exact split only (no clamped / re-read blocks). 2-way only helps on
        # v7x's dual TensorCores; single-TC chips default to 1.
        splits = _tensorcores_per_chip() if num_splits is None else int(num_splits)
        splits = max(1, splits)
        if total_tiles < splits or total_tiles % splits != 0:
            splits = 1
        tiles_per_split = total_tiles // splits

        last_tile_rows = rows - (total_tiles - 1) * tr
        mask_last = (last_tile_rows != tr)

        kernel = functools.partial(
            _dice_sums_kernel,
            tile_rows=int(tr),
            last_tile_rows=int(last_tile_rows),
            mask_last=bool(mask_last))

        def in_map(c, j):
            return (c * tiles_per_split + j, 0)

        partials = pl.pallas_call(
            kernel,
            out_shape=jax.ShapeDtypeStruct((splits, 3, LANES), jnp.float32),
            grid_spec=pltpu.PrefetchScalarGridSpec(
                num_scalar_prefetch=0,
                grid=(splits, tiles_per_split),
                in_specs=[
                    pl.BlockSpec((tr, LANES), in_map),
                    pl.BlockSpec((tr, LANES), in_map),
                ],
                out_specs=pl.BlockSpec((1, 3, LANES), lambda c, j: (c, 0, 0)),
                scratch_shapes=[
                    pltpu.VMEM((1, LANES), jnp.float32),  # sum(p * t)
                    pltpu.VMEM((1, LANES), jnp.float32),  # sum(p)
                    pltpu.VMEM((1, LANES), jnp.float32),  # sum(t)
                ],
            ),
            compiler_params=pltpu.CompilerParams(
                dimension_semantics=("parallel", "arbitrary"),
                vmem_limit_bytes=32 * 1024 * 1024,
            ),
        )(p2d, t2d)

        sums = jnp.sum(partials, axis=(0, 2))   # [intersection, sum_p, sum_t]
        sum_i, sum_p, sum_t = sums[0], sums[1], sums[2]

    if tail:
        # Tiny (<128 element) ragged tail handled outside the kernel: avoids a
        # full-array pad copy of both inputs.
        p_tail = jax.nn.sigmoid(p_flat[rows * LANES:].astype(jnp.float32))
        t_tail = t_flat[rows * LANES:].astype(jnp.float32)
        sum_i = sum_i + jnp.sum(p_tail * t_tail)
        sum_p = sum_p + jnp.sum(p_tail)
        sum_t = sum_t + jnp.sum(t_tail)

    dice = (2.0 * sum_i + smooth) / (sum_p + sum_t + smooth)
    return 1.0 - dice


def _reference(preds, targets, smooth=1.0):
    p = jax.nn.sigmoid(preds.astype(jnp.float32)).reshape(-1)
    t = targets.astype(jnp.float32).reshape(-1)
    inter = jnp.sum(p * t)
    dice = (2.0 * inter + smooth) / (jnp.sum(p) + jnp.sum(t) + smooth)
    return 1.0 - dice


if __name__ == "__main__":
    key = jax.random.PRNGKey(0)
    k_p, k_t = jax.random.split(key)

    # NCHW like the PyTorch module: batch=2, channels=4, spatial=16x16.
    preds = jax.random.normal(k_p, (2, 4, 16, 16), dtype=jnp.float32)
    targets = (jax.random.uniform(k_t, (2, 4, 16, 16)) > 0.5).astype(jnp.float32)
    loss = jax.block_until_ready(dice_loss(preds, targets, smooth=1.0))
    ref = _reference(preds, targets, smooth=1.0)
    assert jnp.allclose(loss, ref, rtol=1e-5, atol=1e-5), (loss, ref)

    # Ragged size: 4845 elements -> 37 full lane-rows in the kernel + 109-elem
    # tail handled in the wrapper epilogue (no pad copy).
    k_p2, k_t2 = jax.random.split(k_p)
    preds2 = jax.random.normal(k_p2, (3, 5, 17, 19), dtype=jnp.float32)
    targets2 = (jax.random.uniform(k_t2, (3, 5, 17, 19)) > 0.5).astype(jnp.float32)
    loss2 = jax.block_until_ready(dice_loss(preds2, targets2, smooth=1.0))
    assert jnp.allclose(loss2, _reference(preds2, targets2), rtol=1e-5, atol=1e-5)

    # Multi-tile with a partial last tile + explicit 2-way exact split
    # (exercises the pl.when-gated mask path and the per-split output blocks).
    k_p3, k_t3 = jax.random.split(k_t)
    preds3 = jax.random.normal(k_p3, (2, 4, 16, 24), dtype=jnp.float32)
    targets3 = (jax.random.uniform(k_t3, (2, 4, 16, 24)) > 0.5).astype(jnp.float32)
    loss3 = jax.block_until_ready(
        dice_loss(preds3, targets3, smooth=1.0, tile_rows=16, num_splits=2))
    assert jnp.allclose(loss3, _reference(preds3, targets3), rtol=1e-5, atol=1e-5)

    # Tiny input (< 128 elements): pure epilogue path (no kernel launch).
    k_p4, k_t4 = jax.random.split(k_p2)
    preds4 = jax.random.normal(k_p4, (1, 1, 5, 7), dtype=jnp.float32)
    targets4 = (jax.random.uniform(k_t4, (1, 1, 5, 7)) > 0.5).astype(jnp.float32)
    loss4 = jax.block_until_ready(dice_loss(preds4, targets4, smooth=1.0))
    assert jnp.allclose(loss4, _reference(preds4, targets4), rtol=1e-5, atol=1e-5)

    print("KERNEL_OK")
</pallas_src>

<mosaic_0001>
module attributes {stable_mosaic.version = 11 : i64} {
  func.func @_dice_sums_kernel(%arg0: i32, %arg1: i32, %arg2: memref<16x128xf32, #tpu.memory_space<vmem>>, %arg3: memref<16x128xf32, #tpu.memory_space<vmem>>, %arg4: memref<1x3x128xf32, #tpu.memory_space<vmem>>, %arg5: memref<1x128xf32, #tpu.memory_space<vmem>>, %arg6: memref<1x128xf32, #tpu.memory_space<vmem>>, %arg7: memref<1x128xf32, #tpu.memory_space<vmem>>) attributes {dimension_semantics = [#tpu.dimension_semantics<parallel>, #tpu.dimension_semantics<arbitrary>], iteration_bounds = array<i64: 1, 1>, scalar_prefetch = 0 : i64, scratch_operands = 3 : i64, tpu.core_type = #tpu.core_type<tc>, window_params = [{transform_indices = @transform_0, window_bounds = array<i64: 16, 128>}, {transform_indices = @transform_1, window_bounds = array<i64: 16, 128>}, {transform_indices = @transform_2, window_bounds = array<i64: 1, 3, 128>}]} {
    %c0_i32 = arith.constant 0 : i32
    %0 = arith.cmpi eq, %arg1, %c0_i32 : i32
    %1 = arith.extui %0 : i1 to i32
    %c0_i32_0 = arith.constant 0 : i32
    %2 = arith.cmpi ne, %1, %c0_i32_0 : i32
    scf.if %2 {
      %cst_21 = arith.constant 0.000000e+00 : f32
      %29 = vector.broadcast %cst_21 : f32 to vector<1x128xf32>
      %c0_22 = arith.constant 0 : index
      %c0_23 = arith.constant 0 : index
      %30 = vector.load %arg5[%c0_22, %c0_23] : memref<1x128xf32, #tpu.memory_space<vmem>>, vector<1x128xf32>
      tpu.vector_store %arg5[%c0_22, %c0_23], %29 {strides = array<i32>} : memref<1x128xf32, #tpu.memory_space<vmem>>, vector<1x128xf32>,
      %cst_24 = arith.constant 0.000000e+00 : f32
      %31 = vector.broadcast %cst_24 : f32 to vector<1x128xf32>
      %c0_25 = arith.constant 0 : index
      %c0_26 = arith.constant 0 : index
      %32 = vector.load %arg6[%c0_25, %c0_26] : memref<1x128xf32, #tpu.memory_space<vmem>>, vector<1x128xf32>
      tpu.vector_store %arg6[%c0_25, %c0_26], %31 {strides = array<i32>} : memref<1x128xf32, #tpu.memory_space<vmem>>, vector<1x128xf32>,
      %cst_27 = arith.constant 0.000000e+00 : f32
      %33 = vector.broadcast %cst_27 : f32 to vector<1x128xf32>
      %c0_28 = arith.constant 0 : index
      %c0_29 = arith.constant 0 : index
      %34 = vector.load %arg7[%c0_28, %c0_29] : memref<1x128xf32, #tpu.memory_space<vmem>>, vector<1x128xf32>
      tpu.vector_store %arg7[%c0_28, %c0_29], %33 {strides = array<i32>} : memref<1x128xf32, #tpu.memory_space<vmem>>, vector<1x128xf32>,
    } else {
    }
    %c0 = arith.constant 0 : index
    %c0_1 = arith.constant 0 : index
    %3 = vector.load %arg2[%c0, %c0_1] : memref<16x128xf32, #tpu.memory_space<vmem>>, vector<16x128xf32>
    %4 = arith.negf %3 : vector<16x128xf32>
    %5 = math.exp %4 : vector<16x128xf32>
    %cst = arith.constant 1.000000e+00 : f32
    %6 = vector.broadcast %cst : f32 to vector<16x128xf32>
    %7 = arith.addf %6, %5 : vector<16x128xf32>
    %8 = arith.divf %6, %7 : vector<16x128xf32>
    %c0_2 = arith.constant 0 : index
    %c0_3 = arith.constant 0 : index
    %9 = vector.load %arg3[%c0_2, %c0_3] : memref<16x128xf32, #tpu.memory_space<vmem>>, vector<16x128xf32>
    %c0_4 = arith.constant 0 : index
    %c0_5 = arith.constant 0 : index
    %10 = vector.load %arg5[%c0_4, %c0_5] : memref<1x128xf32, #tpu.memory_space<vmem>>, vector<1x128xf32>
    %11 = arith.mulf %8, %9 : vector<16x128xf32>
    %cst_6 = arith.constant dense<0.000000e+00> : vector<128xf32>
    %12 = vector.multi_reduction <add>, %11, %cst_6 [0] : vector<16x128xf32> to vector<128xf32>
    %13 = vector.shape_cast %12 : vector<128xf32> to vector<1x128xf32>
    %14 = arith.addf %10, %13 : vector<1x128xf32>
    %c0_7 = arith.constant 0 : index
    %c0_8 = arith.constant 0 : index
    %15 = vector.load %arg5[%c0_7, %c0_8] : memref<1x128xf32, #tpu.memory_space<vmem>>, vector<1x128xf32>
    tpu.vector_store %arg5[%c0_7, %c0_8], %14 {strides = array<i32>} : memref<1x128xf32, #tpu.memory_space<vmem>>, vector<1x128xf32>,
    %c0_9 = arith.constant 0 : index
    %c0_10 = arith.constant 0 : index
    %16 = vector.load %arg6[%c0_9, %c0_10] : memref<1x128xf32, #tpu.memory_space<vmem>>, vector<1x128xf32>
    %cst_11 = arith.constant dense<0.000000e+00> : vector<128xf32>
    %17 = vector.multi_reduction <add>, %8, %cst_11 [0] : vector<16x128xf32> to vector<128xf32>
    %18 = vector.shape_cast %17 : vector<128xf32> to vector<1x128xf32>
    %19 = arith.addf %16, %18 : vector<1x128xf32>
    %c0_12 = arith.constant 0 : index
    %c0_13 = arith.constant 0 : index
    %20 = vector.load %arg6[%c0_12, %c0_13] : memref<1x128xf32, #tpu.memory_space<vmem>>, vector<1x128xf32>
    tpu.vector_store %arg6[%c0_12, %c0_13], %19 {strides = array<i32>} : memref<1x128xf32, #tpu.memory_space<vmem>>, vector<1x128xf32>,
    %c0_14 = arith.constant 0 : index
    %c0_15 = arith.constant 0 : index
    %21 = vector.load %arg7[%c0_14, %c0_15] : memref<1x128xf32, #tpu.memory_space<vmem>>, vector<1x128xf32>
    %cst_16 = arith.constant dense<0.000000e+00> : vector<128xf32>
    %22 = vector.multi_reduction <add>, %9, %cst_16 [0] : vector<16x128xf32> to vector<128xf32>
    %23 = vector.shape_cast %22 : vector<128xf32> to vector<1x128xf32>
    %24 = arith.addf %21, %23 : vector<1x128xf32>
    %c0_17 = arith.constant 0 : index
    %c0_18 = arith.constant 0 : index
    %25 = vector.load %arg7[%c0_17, %c0_18] : memref<1x128xf32, #tpu.memory_space<vmem>>, vector<1x128xf32>
    tpu.vector_store %arg7[%c0_17, %c0_18], %24 {strides = array<i32>} : memref<1x128xf32, #tpu.memory_space<vmem>>, vector<1x128xf32>,
    %c0_i32_19 = arith.constant 0 : i32
    %26 = arith.cmpi eq, %arg1, %c0_i32_19 : i32
    %27 = arith.extui %26 : i1 to i32
    %c0_i32_20 = arith.constant 0 : i32
    %28 = arith.cmpi ne, %27, %c0_i32_20 : i32
    scf.if %28 {
      %c0_21 = arith.constant 0 : index
      %c0_22 = arith.constant 0 : index
      %29 = vector.load %arg5[%c0_21, %c0_22] : memref<1x128xf32, #tpu.memory_space<vmem>>, vector<1x128xf32>
      %c0_23 = arith.constant 0 : index
      %c0_24 = arith.constant 0 : index
      %c0_25 = arith.constant 0 : index
      %30 = vector.load %arg4[%c0_23, %c0_24, %c0_25] : memref<1x3x128xf32, #tpu.memory_space<vmem>>, vector<1x1x128xf32>
      %31 = vector.shape_cast %30 : vector<1x1x128xf32> to vector<1x128xf32>
      %32 = vector.shape_cast %29 : vector<1x128xf32> to vector<1x1x128xf32>
      tpu.vector_store %arg4[%c0_23, %c0_24, %c0_25], %32 {strides = array<i32>} : memref<1x3x128xf32, #tpu.memory_space<vmem>>, vector<1x1x128xf32>,
      %c0_26 = arith.constant 0 : index
      %c0_27 = arith.constant 0 : index
      %33 = vector.load %arg6[%c0_26, %c0_27] : memref<1x128xf32, #tpu.memory_space<vmem>>, vector<1x128xf32>
      %c0_28 = arith.constant 0 : index
      %c1 = arith.constant 1 : index
      %c0_29 = arith.constant 0 : index
      %34 = vector.load %arg4[%c0_28, %c1, %c0_29] : memref<1x3x128xf32, #tpu.memory_space<vmem>>, vector<1x1x128xf32>
      %35 = vector.shape_cast %34 : vector<1x1x128xf32> to vector<1x128xf32>
      %36 = vector.shape_cast %33 : vector<1x128xf32> to vector<1x1x128xf32>
      tpu.vector_store %arg4[%c0_28, %c1, %c0_29], %36 {strides = array<i32>} : memref<1x3x128xf32, #tpu.memory_space<vmem>>, vector<1x1x128xf32>,
      %c0_30 = arith.constant 0 : index
      %c0_31 = arith.constant 0 : index
      %37 = vector.load %arg7[%c0_30, %c0_31] : memref<1x128xf32, #tpu.memory_space<vmem>>, vector<1x128xf32>
      %c0_32 = arith.constant 0 : index
      %c2 = arith.constant 2 : index
      %c0_33 = arith.constant 0 : index
      %38 = vector.load %arg4[%c0_32, %c2, %c0_33] : memref<1x3x128xf32, #tpu.memory_space<vmem>>, vector<1x1x128xf32>
      %39 = vector.shape_cast %38 : vector<1x1x128xf32> to vector<1x128xf32>
      %40 = vector.shape_cast %37 : vector<1x128xf32> to vector<1x1x128xf32>
      tpu.vector_store %arg4[%c0_32, %c2, %c0_33], %40 {strides = array<i32>} : memref<1x3x128xf32, #tpu.memory_space<vmem>>, vector<1x1x128xf32>,
    } else {
    }
    return
  }
  func.func @transform_0(%arg0: i32, %arg1: i32) -> (i32, i32) {
    %c1_i32 = arith.constant 1 : i32
    %0 = arith.muli %arg0, %c1_i32 : i32
    %1 = arith.addi %0, %arg1 : i32
    %c0_i32 = arith.constant 0 : i32
    %c0_i32_0 = arith.constant 0 : i32
    return %1, %c0_i32 : i32, i32
  }
  func.func @transform_1(%arg0: i32, %arg1: i32) -> (i32, i32) {
    %c1_i32 = arith.constant 1 : i32
    %0 = arith.muli %arg0, %c1_i32 : i32
    %1 = arith.addi %0, %arg1 : i32
    %c0_i32 = arith.constant 0 : i32
    %c0_i32_0 = arith.constant 0 : i32
    return %1, %c0_i32 : i32, i32
  }
  func.func @transform_2(%arg0: i32, %arg1: i32) -> (i32, i32, i32) {
    %c0_i32 = arith.constant 0 : i32
    %c0_i32_0 = arith.constant 0 : i32
    %c0_i32_1 = arith.constant 0 : i32
    return %arg0, %c0_i32, %c0_i32_0 : i32, i32, i32
  }
}

</mosaic_0001>

<llo_original>
// kernel: tpu_custom_call.1
$region0: #{tpu_custom_call.1}
  #allocation0 [shape = 'u32[]', space=smem, size = 0x4, offset = 0x4, fixed_abs, tag = 'smem constant byte address 0x4 - core index']
  #allocation1 [shape = 'u32[72,128]{1,0:T(1,128)}', space=vmem, size = 0x9000, scoped, tag = 'internal scratch']
  #allocation2 [shape = 'f32[1,128]{1,0:T(1,128)}', space=vmem, size = 0x200, scoped, tag = 'scratch operand']
  #allocation3 [shape = 'f32[1,128]{1,0:T(1,128)}', space=vmem, size = 0x200, scoped, tag = 'scratch operand']
  #allocation4 [shape = 'f32[1,128]{1,0:T(1,128)}', space=vmem, size = 0x200, scoped, tag = 'scratch operand']
  %s0 = inlined_call_operand.hbm [shape: f32[16,128], index: 0, kind: input, shape index: {}]
  %s1 = inlined_call_operand.hbm [shape: f32[16,128], index: 1, kind: input, shape index: {}]
  %s2 = inlined_call_operand.vmem [shape: f32[1,3,128], index: 2, kind: output, shape index: {}]
  %s3 = sld [smem:[#allocation0]]
  $region34: #{tpu_custom_call.1} parent=0
    _
  %s5 = ssub.s32 1, %s3
  %s6 = scalar_select 0, %s5, %s3
  $region1: #{tpu_custom_call.1} parent=0
    #allocation5 [shape = 'u8[8192]{0}', space=vmem, size = 0x2000, scoped, tag = 'input window, operand 0, single buffered']
    #allocation6 [shape = 's32[1]{0}', space=sflag, size = 0x4, scoped, tag = 'scoped memory for tpu_custom_call.1']
    #allocation7 [shape = 'u8[8192]{0}', space=vmem, size = 0x2000, scoped, tag = 'input window, operand 1, single buffered']
    #allocation8 [shape = 's32[1]{0}', space=sflag, size = 0x4, scoped, tag = 'scoped memory for tpu_custom_call.1']
    %7 = vsyncpa [#allocation6], 0
    %8 = vsyncpa [#allocation8], 0
    // Predicated region
    $region2: #{tpu_custom_call.1} parent=1 // pred_check
      _
    $region3: #{tpu_custom_call.1} parent=1 // pred_check_branch
      %10 = sbr.rel (0) target = $region5
    $region4: #{tpu_custom_call.1} parent=1 // pred_region
      %s11 = sadd.s32 0, 0
      %s12 = smul.u32 2, %s11
      %14 = vsyncadd [#allocation6], 0
      %s15 = smul.addr %s12, 8
      %s16 = scalar_lea.hbm %s0, %s15
      %s17 = sshll.u32 %s16, 4
      %s18 = int_to_ptr.hbm [resolvable:$true] %s17
      %s19 = sshll.u32 [#allocation5], 4
      %s20 = int_to_ptr.vmem [resolvable:$true] %s19
      %25 = dma.hbm_to_vmem [thread:$0]  %s18, 256, %s20, [#allocation6], 128, 128, 8
    $region5: #{tpu_custom_call.1} parent=1 // pred_fallthru
      _
    // Predicated region
    $region6: #{tpu_custom_call.1} parent=1 // pred_check
      _
    $region7: #{tpu_custom_call.1} parent=1 // pred_check_branch
      %27 = sbr.rel (0) target = $region9
    $region8: #{tpu_custom_call.1} parent=1 // pred_region
      %s28 = sadd.s32 0, 0
      %s29 = smul.u32 2, %s28
      %31 = vsyncadd [#allocation8], 0
      %s32 = smul.addr %s29, 8
      %s33 = scalar_lea.hbm %s1, %s32
      %s34 = sshll.u32 %s33, 4
      %s35 = int_to_ptr.hbm [resolvable:$true] %s34
      %s36 = sshll.u32 [#allocation7], 4
      %s37 = int_to_ptr.vmem [resolvable:$true] %s36
      %42 = dma.hbm_to_vmem [thread:$0]  %s35, 256, %s37, [#allocation8], 128, 128, 8
    $region9: #{tpu_custom_call.1} parent=1 // pred_fallthru
      _
    // Predicated region
    $region10: #{tpu_custom_call.1} parent=1 // pred_check
      _
    $region11: #{tpu_custom_call.1} parent=1 // pred_check_branch
      %44 = sbr.rel (0) target = $region13
    $region12: #{tpu_custom_call.1} parent=1 // pred_region
      %46 = dma.done [#allocation6], 256
    $region13: #{tpu_custom_call.1} parent=1 // pred_fallthru
      _
    // Predicated region
    $region14: #{tpu_custom_call.1} parent=1 // pred_check
      _
    $region15: #{tpu_custom_call.1} parent=1 // pred_check_branch
      %48 = sbr.rel (0) target = $region17
    $region16: #{tpu_custom_call.1} parent=1 // pred_region
      %50 = dma.done [#allocation8], 256
    $region17: #{tpu_custom_call.1} parent=1 // pred_fallthru
      _
    %s51 = sadd.s32 0, 0
    %s52 = smul.u32 2, %s51
    %s53 = sadd.s32 0, 0
    %s54 = smul.u32 2, %s53
    %p55 = scmp.eq.s32.totalorder 0, 0
    // Predicated region
    $region18: #{tpu_custom_call.1} parent=1 // pred_check
      %p56 = pneg %p55
    $region19: #{tpu_custom_call.1} parent=1 // pred_check_branch
      %58 = sbr.rel (%p56) target = $region21
    $region20: #{tpu_custom_call.1} parent=1 // pred_region
      %59 = vst [vmem:[#allocation2] sm:$0x1] 0.0
      %60 = vst [vmem:[#allocation3] sm:$0x1] 0.0
      %61 = vst [vmem:[#allocation4] sm:$0x1] 0.0
    $region21: #{tpu_custom_call.1} parent=1 // pred_fallthru
      _
    %v62 = vld [vmem:[#allocation5] sm:$0xff]
    %v63 = vld [vmem:[#allocation5 + $0x8] sm:$0xff]
    %v64 = vxor.u32 %v62, 2147483648
    %v65 = vxor.u32 %v63, 2147483648
    %v66 = vmul.f32 %v64, 1.442695
    %v67 = vpow.pop %v66
    %v68 = vmul.f32 %v65, 1.442695
    %v69 = vpow.pop %v68
    %v70 = vadd.f32 %v67, 1.0
    %v71 = vadd.f32 %v69, 1.0
    %v72 = vrcp.pop %v70
    %v73 = vmul.f32 %v70, %v72
    %v74 = vsub.f32 1.0, %v73
    %v75 = vmul.f32 %v72, %v74
    %v76 = vadd.f32 %v72, %v75
    %vm77 = vweird.f32 %v70
    %vm78 = vweird.f32 %v72
    %vm79 = vmor %vm77, %vm78
    %v80 = vsel %vm79, %v72, %v76
    %v81 = vand.u32 2147483647, %v70
    %vm82 = vcmp.eq.f32.partialorder %v81, 8.507059e+37
    %v83 = vand.u32 %v70, 2147483648
    %v84 = vor.u32 1.1754944e-38, %v83
    %v85 = vsel %vm82, %v84, %v80
    %v86 = vmul.f32 1.0, %v85
    %v87 = vrcp.pop %v71
    %v88 = vmul.f32 %v71, %v87
    %v89 = vsub.f32 1.0, %v88
    %v90 = vmul.f32 %v87, %v89
    %v91 = vadd.f32 %v87, %v90
    %vm92 = vweird.f32 %v71
    %vm93 = vweird.f32 %v87
    %vm94 = vmor %vm92, %vm93
    %v95 = vsel %vm94, %v87, %v91
    %v96 = vand.u32 2147483647, %v71
    %vm97 = vcmp.eq.f32.partialorder %v96, 8.507059e+37
    %v98 = vand.u32 %v71, 2147483648
    %v99 = vor.u32 1.1754944e-38, %v98
    %v100 = vsel %vm97, %v99, %v95
    %v101 = vmul.f32 1.0, %v100
    %v102 = vld [vmem:[#allocation7] sm:$0xff]
    %v103 = vld [vmem:[#allocation7 + $0x8] sm:$0xff]
    %v104 = vld [vmem:[#allocation2] sm:$0x1]
    %v105 = vmul.f32 %v86, %v102
    %v106 = vmul.f32 %v101, %v103
    %v107 = vadd.f32 %v105, %v106
    %v108 = vrot.slane %v107, 4
    %v109 = vadd.f32 %v107, %v108
    %v110 = vrot.slane %v109, 2
    %v111 = vadd.f32 %v109, %v110
    %v112 = vrot.slane %v111, 1
    %v113 = vadd.f32 %v111, %v112
    %v114 = vadd.f32 %v104, %v113
    %115 = vst [vmem:[#allocation2] sm:$0x1] %v114
    %v116 = vld [vmem:[#allocation3] sm:$0x1]
    %v117 = vadd.f32 %v86, %v101
    %v118 = vrot.slane %v117, 4
    %v119 = vadd.f32 %v117, %v118
    %v120 = vrot.slane %v119, 2
    %v121 = vadd.f32 %v119, %v120
    %v122 = vrot.slane %v121, 1
    %v123 = vadd.f32 %v121, %v122
    %v124 = vadd.f32 %v116, %v123
    %125 = vst [vmem:[#allocation3] sm:$0x1] %v124
    %v126 = vld [vmem:[#allocation4] sm:$0x1]
    %v127 = vadd.f32 %v102, %v103
    %v128 = vrot.slane %v127, 4
    %v129 = vadd.f32 %v127, %v128
    %v130 = vrot.slane %v129, 2
    %v131 = vadd.f32 %v129, %v130
    %v132 = vrot.slane %v131, 1
    %v133 = vadd.f32 %v131, %v132
    %v134 = vadd.f32 %v126, %v133
    %135 = vst [vmem:[#allocation4] sm:$0x1] %v134
    // Predicated region
    $region22: #{tpu_custom_call.1} parent=1 // pred_check
      %p136 = pneg %p55
    $region23: #{tpu_custom_call.1} parent=1 // pred_check_branch
      %138 = sbr.rel (%p136) target = $region25
    $region24: #{tpu_custom_call.1} parent=1 // pred_region
      %v139 = vld [vmem:[#allocation2] sm:$0x1]
      %140 = vst [vmem:[%s2] sm:$0x1] %v139
      %v141 = vld [vmem:[#allocation3] sm:$0x1]
      %142 = vst [vmem:[%s2 + $0x1] sm:$0x1] %v141
      %v143 = vld [vmem:[#allocation4] sm:$0x1]
      %144 = vst [vmem:[%s2 + $0x2] sm:$0x1] %v143
    $region25: #{tpu_custom_call.1} parent=1 // pred_fallthru
      _
    // Predicated region
    $region26: #{tpu_custom_call.1} parent=1 // pred_check
      _
    $region27: #{tpu_custom_call.1} parent=1 // pred_check_branch
      %146 = sbr.rel (0) target = $region29
    $region28: #{tpu_custom_call.1} parent=1 // pred_region
      _
    $region29: #{tpu_custom_call.1} parent=1 // pred_fallthru
      _
    // Predicated region
    $region30: #{tpu_custom_call.1} parent=1 // pred_check
      _
    $region31: #{tpu_custom_call.1} parent=1 // pred_check_branch
      %148 = sbr.rel (0) target = $region33
    $region32: #{tpu_custom_call.1} parent=1 // pred_region
      _
    $region33: #{tpu_custom_call.1} parent=1 // pred_fallthru
      _
    %149 = vsyncpa [#allocation6], 1
    %150 = vsyncpa [#allocation8], 1

</llo_original>
